<compile_context>
chip_gen: v5e
topology: v5e:2x2
jax: 0.10.0
libtpu: 0.0.40
codegen_flags: <defaults>
</compile_context>

<pallas_src>
import functools

import jax
import jax.numpy as jnp
from jax import lax
from jax.experimental import pallas as pl
from jax.experimental.pallas import tpu as pltpu


# --------------------------------------------------------------------------
# Phase 1: fused 1x1-conv projections (+ bias + PReLU), channel-major.
# --------------------------------------------------------------------------
def proj_kernel(x_ref,        # [1, C, tp]  f32   input pixels, channel-major
                wt_ref,       # [Ctot, C]   f32   concatenated weights, pre-transposed
                b_ref,        # [Ctot, 1]   f32   concatenated biases
                a_ref,        # [Ctot, 1]   f32   per-row PReLU slopes
                e1_ref,       # [1, Cr, tp] bf16  channel-major
                e2_ref,       # [1, tp, Cr] (or [1, Cr, tp]) bf16
                xa_ref,       # [1, C, tp]  bf16  channel-major
                *, transpose_e2):
    Cr = e1_ref.shape[1]
    # One MXU pass for all three projections: [Ctot, C] x [C, tp] -> [Ctot, tp].
    proj = jnp.dot(wt_ref[...], x_ref[0], preferred_element_type=jnp.float32)
    proj = proj + b_ref[...]
    proj = jnp.where(proj >= 0, proj, a_ref[...] * proj)       # per-row PReLU

    e1_ref[0] = proj[:Cr, :].astype(jnp.bfloat16)
    if transpose_e2:
        # Pixel-major e2: one small XLU transpose per pixel tile, so Phase 2's
        # score matmul needs no per-(q,kv) relayout.
        e2_ref[0] = jnp.transpose(proj[Cr:2 * Cr, :]).astype(jnp.bfloat16)
    else:
        e2_ref[0] = proj[Cr:2 * Cr, :].astype(jnp.bfloat16)
    xa_ref[0] = proj[2 * Cr:, :].astype(jnp.bfloat16)


# --------------------------------------------------------------------------
# Phase 2: attention with per-image-resident e2/xa and online softmax.
# --------------------------------------------------------------------------
def flash_kernel(e1_ref,      # [1, Cr, tq] bf16  query tile, channel-major
                 e2_ref,      # [1, HW, Cr] bf16  resident per image, pixel-major
                 xa_ref,      # [1, C, HW]  bf16  resident per image, channel-major
                 o_ref,       # [1, C, tq]  f32   output tile, channel-major
                 *, tk, max_unrolled_kv=16):
    tq = e1_ref.shape[2]
    C = xa_ref.shape[1]
    HW = e2_ref.shape[1]
    nk = HW // tk

    e1 = e1_ref[0]                                           # [Cr, tq] bf16

    def step(off, m, l, acc):
        e2t = e2_ref[0, pl.ds(off, tk), :]                   # [tk, Cr] (sublane slice)
        xat = xa_ref[0, :, pl.ds(off, tk)]                   # [C, tk]  (lane slice)
        # Transposed scores: s[k, q] = <e2_k, e1_q>; plain [tk,Cr]x[Cr,tq] MXU form.
        s = jnp.dot(e2t, e1, preferred_element_type=jnp.float32)          # [tk, tq]
        m_new = jnp.maximum(m, jnp.max(s, axis=0, keepdims=True))         # [1, tq]
        alpha = jnp.exp(m - m_new)
        p = jnp.exp(s - m_new)                                             # [tk, tq]
        l_new = alpha * l + jnp.sum(p, axis=0, keepdims=True)
        acc_new = alpha * acc + jnp.dot(                                   # [C, tq]
            xat, p.astype(jnp.bfloat16), preferred_element_type=jnp.float32)
        return m_new, l_new, acc_new

    m = jnp.full((1, tq), -jnp.inf, dtype=jnp.float32)
    l = jnp.zeros((1, tq), dtype=jnp.float32)
    acc = jnp.zeros((C, tq), dtype=jnp.float32)

    if nk <= max_unrolled_kv:
        # Static offsets -> static, always-supported slices of the resident refs.
        for kv in range(nk):
            m, l, acc = step(kv * tk, m, l, acc)
    else:
        # TODO(synk): the dynamic lane slice of xa requires tk to be a multiple
        # of 128 (alignment); pad + key-mask HW for shapes that cannot satisfy it.
        def body(kv, carry):
            off = pl.multiple_of(kv * tk, tk)
            return step(off, *carry)
        m, l, acc = lax.fori_loop(0, nk, body, (m, l, acc))

    # Exact division: runs once per q-tile, approx reciprocal buys nothing here.
    o_ref[0] = (acc / l).astype(o_ref.dtype)


# --------------------------------------------------------------------------
# Wrapper.
# --------------------------------------------------------------------------
def _pick_tile(total, candidates):
    for t in candidates:
        if t <= total and total % t == 0:
            return t
    if total <= 1024:
        return total            # single full-dim tile; score tile stays <= 4 MiB
    raise ValueError(
        f"H*W = {total} is not divisible by 128; pad the spatial dims first. "
        "TODO(synk): add padding + key masking for ragged HW.")


def _clamp_vmem(nbytes):
    # Leave headroom; cap at 64 MiB so the request is also valid on v7x.
    return int(min(max(32 * 1024 * 1024, 2 * nbytes), 64 * 1024 * 1024))


def non_local_attention(x_nchw, params, *, tq=None, tk=None, tp=None):
    """x_nchw: [N, C, H, W] float32. Returns [N, C, H, W] float32."""
    N, C, H, W = x_nchw.shape
    HW = H * W
    Cr = C // 2
    Ctot = 2 * Cr + C

    tq = _pick_tile(HW, (256, 128)) if tq is None else tq
    tk = _pick_tile(HW, (512, 256, 128)) if tk is None else tk
    tp = _pick_tile(HW, (2048, 1024, 512, 256, 128)) if tp is None else tp
    for name, t in (("tq", tq), ("tk", tk), ("tp", tp)):
        assert HW % t == 0, f"{name}={t} must divide H*W={HW}"
        assert t % 128 == 0 or t == HW, \
            f"{name}={t} must be a multiple of 128 (or equal H*W)"

    # NCHW -> [N, C, HW]: a free reshape (no transpose).
    x = x_nchw.reshape(N, C, HW)

    # Concatenate the three 1x1-conv weights so Phase 1 is a single matmul,
    # pre-transposed to [Ctot, C] for the channel-major contraction.
    wt = jnp.concatenate([params["w1"], params["w2"], params["wa"]], axis=1).T
    b = jnp.concatenate([params["b1"], params["b2"], params["ba"]], axis=1).T
    alpha = jnp.concatenate([
        jnp.full((Cr,), params["alpha1"], jnp.float32),
        jnp.full((Cr,), params["alpha2"], jnp.float32),
        jnp.full((C,), params["alpha_a"], jnp.float32)]).reshape(Ctot, 1)

    # e2 leaves the fused matmul channel-major; transpose it to pixel-major
    # inside the kernel when the slice is sublane-aligned, otherwise (toy
    # channel counts, Cr < 8) with a tiny bf16 XLA swapaxes afterwards.
    transpose_e2 = (Cr % 8 == 0) and (tp % 128 == 0)
    e2_shape = (N, HW, Cr) if transpose_e2 else (N, Cr, HW)
    e2_spec = (pl.BlockSpec((1, tp, Cr), lambda n, p: (n, p, 0)) if transpose_e2
               else pl.BlockSpec((1, Cr, tp), lambda n, p: (n, 0, p)))

    full2d = lambda shape: pl.BlockSpec(shape, lambda n, p: (0, 0))

    p1_vmem = (2 * C * tp * 4                   # x tile (double buffered)
               + Ctot * C * 4 + 4 * Ctot * 4    # weights / bias / slopes
               + 4 * Ctot * tp * 2              # bf16 outputs (double buffered)
               + 2 * Ctot * tp * 4)             # f32 intermediates

    e1, e2, xa = pl.pallas_call(
        functools.partial(proj_kernel, transpose_e2=transpose_e2),
        out_shape=(jax.ShapeDtypeStruct((N, Cr, HW), jnp.bfloat16),
                   jax.ShapeDtypeStruct(e2_shape, jnp.bfloat16),
                   jax.ShapeDtypeStruct((N, C, HW), jnp.bfloat16)),
        grid_spec=pltpu.PrefetchScalarGridSpec(
            num_scalar_prefetch=0,
            grid=(N, HW // tp),
            in_specs=[
                pl.BlockSpec((1, C, tp), lambda n, p: (n, 0, p)),    # x
                full2d((Ctot, C)),                                   # W_cat^T
                full2d((Ctot, 1)),                                   # bias
                full2d((Ctot, 1)),                                   # PReLU slopes
            ],
            out_specs=(
                pl.BlockSpec((1, Cr, tp), lambda n, p: (n, 0, p)),   # e1 (ch-major)
                e2_spec,                                             # e2
                pl.BlockSpec((1, C, tp), lambda n, p: (n, 0, p)),    # xa (ch-major)
            ),
        ),
        compiler_params=pltpu.CompilerParams(
            dimension_semantics=("parallel", "parallel"),
            vmem_limit_bytes=_clamp_vmem(p1_vmem)),
        cost_estimate=pl.CostEstimate(
            flops=int(2 * N * HW * C * Ctot),
            transcendentals=0,
            bytes_accessed=int(4 * N * HW * C + 2 * N * HW * Ctot
                               + 4 * Ctot * (C + 2))),
    )(x, wt, b, alpha)

    if not transpose_e2:
        # Tiny bf16 transpose (N*HW*Cr elements); only hit when Cr < 8.
        e2 = jnp.swapaxes(e2, 1, 2)                                  # [N, HW, Cr]

    # ------------- Phase 2: resident e2/xa + online softmax -------------
    p2_vmem = (2 * HW * Cr * 2 + 2 * HW * C * 2       # resident e2, xa (x2 buffers)
               + 2 * Cr * tq * 2 + 2 * C * tq * 4     # e1 in, out (double buffered)
               + 8 * tk * tq * 4 + 4 * C * tq * 4)    # s/p working set + accumulator

    out = pl.pallas_call(
        functools.partial(flash_kernel, tk=tk),
        out_shape=jax.ShapeDtypeStruct((N, C, HW), jnp.float32),
        grid_spec=pltpu.PrefetchScalarGridSpec(
            num_scalar_prefetch=0,
            grid=(N, HW // tq),
            in_specs=[
                pl.BlockSpec((1, Cr, tq), lambda n, i: (n, 0, i)),   # e1 q-tile
                pl.BlockSpec((1, HW, Cr), lambda n, i: (n, 0, 0)),   # e2: resident/img
                pl.BlockSpec((1, C, HW), lambda n, i: (n, 0, 0)),    # xa: resident/img
            ],
            out_specs=pl.BlockSpec((1, C, tq), lambda n, i: (n, 0, i)),
        ),
        compiler_params=pltpu.CompilerParams(
            dimension_semantics=("parallel", "parallel"),
            vmem_limit_bytes=_clamp_vmem(p2_vmem)),
        cost_estimate=pl.CostEstimate(
            flops=int(2 * N * HW * HW * (Cr + C)),
            transcendentals=int(N * HW * HW),
            bytes_accessed=int(2 * N * HW * (2 * Cr + C) + 4 * N * HW * C)),
    )(e1, e2, xa)

    # [N, C, HW] -> NCHW: free reshape, no transpose.
    return out.reshape(N, C, H, W)


# --------------------------------------------------------------------------
# Synthetic params + pure-JAX reference.
# --------------------------------------------------------------------------
def init_params(key, channel):
    """Deterministic synthetic weights for the three 1x1 ConvBlocks."""
    Cr = channel // 2
    ks = jax.random.split(key, 6)
    scale = 0.1
    return {
        "w1": scale * jax.random.normal(ks[0], (channel, Cr), jnp.float32),
        "b1": scale * jax.random.normal(ks[1], (1, Cr), jnp.float32),
        "w2": scale * jax.random.normal(ks[2], (channel, Cr), jnp.float32),
        "b2": scale * jax.random.normal(ks[3], (1, Cr), jnp.float32),
        "wa": scale * jax.random.normal(ks[4], (channel, channel), jnp.float32),
        "ba": scale * jax.random.normal(ks[5], (1, channel), jnp.float32),
        # nn.PReLU() default single-parameter init
        "alpha1": jnp.float32(0.25),
        "alpha2": jnp.float32(0.25),
        "alpha_a": jnp.float32(0.25),
    }


def _reference(x_nchw, params):
    """Pure-JAX (f32) reference mirroring the PyTorch forward exactly."""
    N, C, H, W = x_nchw.shape
    HW = H * W
    x = jnp.transpose(x_nchw, (0, 2, 3, 1)).reshape(N, HW, C)

    def prelu(v, a):
        return jnp.where(v >= 0, v, a * v)

    e1 = prelu(x @ params["w1"] + params["b1"], params["alpha1"])    # [N,HW,Cr]
    e2 = prelu(x @ params["w2"] + params["b2"], params["alpha2"])    # [N,HW,Cr]
    xa = prelu(x @ params["wa"] + params["ba"], params["alpha_a"])   # [N,HW,C]
    score = jnp.einsum("nic,njc->nij", e1, e2)
    score = jax.nn.softmax(score, axis=2)
    out = jnp.einsum("nij,njc->nic", score, xa)                      # [N,HW,C]
    return jnp.transpose(out.reshape(N, H, W, C), (0, 3, 1, 2))


if __name__ == "__main__":
    key = jax.random.PRNGKey(0)

    # Config 1: exercises the multi-kv-tile online-softmax path (HW=256 ->
    # 2 q-tiles x 2 kv-tiles per image) and the tiny-Cr (< 8) e2 fallback.
    N, C, H, W = 2, 4, 16, 16
    kx, kp, key = jax.random.split(key, 3)
    x = jax.random.normal(kx, (N, C, H, W), jnp.float32)
    params = init_params(kp, C)
    y = jax.block_until_ready(non_local_attention(x, params, tq=128, tk=128))
    y_ref = _reference(x, params)
    assert y.shape == (N, C, H, W)
    # bf16 MXU operands; denominator uses exact division.
    assert jnp.allclose(y, y_ref, atol=1e-2, rtol=1e-2), "mismatch vs ref (cfg 1)"

    # Config 2: sublane-aligned Cr (=8) exercises the in-kernel e2 transpose
    # and the default resident single-kv-tile path.
    N2, C2, H2, W2 = 1, 16, 16, 16
    kx2, kp2, key = jax.random.split(key, 3)
    x2 = jax.random.normal(kx2, (N2, C2, H2, W2), jnp.float32)
    params2 = init_params(kp2, C2)
    y2 = jax.block_until_ready(non_local_attention(x2, params2))
    y2_ref = _reference(x2, params2)
    assert y2.shape == (N2, C2, H2, W2)
    assert jnp.allclose(y2, y2_ref, atol=1e-2, rtol=1e-2), "mismatch vs ref (cfg 2)"

    print("KERNEL_OK")
</pallas_src>

<mosaic_0001>
module attributes {stable_mosaic.version = 11 : i64} {
  func.func @proj_kernel(%arg0: i32, %arg1: i32, %arg2: memref<1x4x256xf32, #tpu.memory_space<vmem>>, %arg3: memref<8x4xf32, #tpu.memory_space<vmem>>, %arg4: memref<8x1xf32, #tpu.memory_space<vmem>>, %arg5: memref<8x1xf32, #tpu.memory_space<vmem>>, %arg6: memref<1x2x256xbf16, #tpu.memory_space<vmem>>, %arg7: memref<1x2x256xbf16, #tpu.memory_space<vmem>>, %arg8: memref<1x4x256xbf16, #tpu.memory_space<vmem>>) attributes {dimension_semantics = [#tpu.dimension_semantics<parallel>, #tpu.dimension_semantics<parallel>], iteration_bounds = array<i64: 2, 1>, scalar_prefetch = 0 : i64, scratch_operands = 0 : i64, tpu.core_type = #tpu.core_type<tc>, window_params = [{transform_indices = @transform_0, window_bounds = array<i64: 1, 4, 256>}, {pipeline_mode = #tpu.pipeline_mode<synchronous>, transform_indices = @transform_1, window_bounds = array<i64: 8, 4>}, {pipeline_mode = #tpu.pipeline_mode<synchronous>, transform_indices = @transform_2, window_bounds = array<i64: 8, 1>}, {pipeline_mode = #tpu.pipeline_mode<synchronous>, transform_indices = @transform_3, window_bounds = array<i64: 8, 1>}, {transform_indices = @transform_4, window_bounds = array<i64: 1, 2, 256>}, {transform_indices = @transform_5, window_bounds = array<i64: 1, 2, 256>}, {transform_indices = @transform_6, window_bounds = array<i64: 1, 4, 256>}]} {
    %c0 = arith.constant 0 : index
    %c0_0 = arith.constant 0 : index
    %0 = vector.load %arg3[%c0, %c0_0] : memref<8x4xf32, #tpu.memory_space<vmem>>, vector<8x4xf32>
    %c0_1 = arith.constant 0 : index
    %c0_2 = arith.constant 0 : index
    %c0_3 = arith.constant 0 : index
    %1 = vector.load %arg2[%c0_1, %c0_2, %c0_3] : memref<1x4x256xf32, #tpu.memory_space<vmem>>, vector<1x4x256xf32>
    %2 = vector.shape_cast %1 : vector<1x4x256xf32> to vector<4x256xf32>
    %cst = arith.constant dense<0.000000e+00> : vector<8x256xf32>
    %3 = tpu.matmul %0, %2, %cst {dimension_numbers = #tpu.dot_dimension_numbers<[1], [0], [0], [1], [0, 0, 1, 1], [], []>} : vector<8x4xf32>, vector<4x256xf32>, vector<8x256xf32> -> vector<8x256xf32>
    %c0_4 = arith.constant 0 : index
    %c0_5 = arith.constant 0 : index
    %4 = vector.load %arg4[%c0_4, %c0_5] : memref<8x1xf32, #tpu.memory_space<vmem>>, vector<8x1xf32>
    %5 = vector.broadcast %4 : vector<8x1xf32> to vector<8x256xf32>
    %6 = arith.addf %3, %5 : vector<8x256xf32>
    %cst_6 = arith.constant 0.000000e+00 : f32
    %7 = vector.broadcast %cst_6 : f32 to vector<8x256xf32>
    %8 = arith.cmpf oge, %6, %7 : vector<8x256xf32>
    %c0_7 = arith.constant 0 : index
    %c0_8 = arith.constant 0 : index
    %9 = vector.load %arg5[%c0_7, %c0_8] : memref<8x1xf32, #tpu.memory_space<vmem>>, vector<8x1xf32>
    %10 = vector.broadcast %9 : vector<8x1xf32> to vector<8x256xf32>
    %11 = arith.mulf %10, %6 : vector<8x256xf32>
    %12 = arith.select %8, %6, %11 : vector<8x256xi1>, vector<8x256xf32>
    %13 = vector.extract_strided_slice %12 {offsets = [0, 0], sizes = [2, 256], strides = [1, 1]} : vector<8x256xf32> to vector<2x256xf32>
    %14 = arith.truncf %13 : vector<2x256xf32> to vector<2x256xbf16>
    %c0_9 = arith.constant 0 : index
    %c0_10 = arith.constant 0 : index
    %c0_11 = arith.constant 0 : index
    %15 = vector.load %arg6[%c0_9, %c0_10, %c0_11] : memref<1x2x256xbf16, #tpu.memory_space<vmem>>, vector<1x2x256xbf16>
    %16 = vector.shape_cast %15 : vector<1x2x256xbf16> to vector<2x256xbf16>
    %17 = vector.shape_cast %14 : vector<2x256xbf16> to vector<1x2x256xbf16>
    tpu.vector_store %arg6[%c0_9, %c0_10, %c0_11], %17 {strides = array<i32>} : memref<1x2x256xbf16, #tpu.memory_space<vmem>>, vector<1x2x256xbf16>,
    %18 = vector.extract_strided_slice %12 {offsets = [2, 0], sizes = [2, 256], strides = [1, 1]} : vector<8x256xf32> to vector<2x256xf32>
    %19 = arith.truncf %18 : vector<2x256xf32> to vector<2x256xbf16>
    %c0_12 = arith.constant 0 : index
    %c0_13 = arith.constant 0 : index
    %c0_14 = arith.constant 0 : index
    %20 = vector.load %arg7[%c0_12, %c0_13, %c0_14] : memref<1x2x256xbf16, #tpu.memory_space<vmem>>, vector<1x2x256xbf16>
    %21 = vector.shape_cast %20 : vector<1x2x256xbf16> to vector<2x256xbf16>
    %22 = vector.shape_cast %19 : vector<2x256xbf16> to vector<1x2x256xbf16>
    tpu.vector_store %arg7[%c0_12, %c0_13, %c0_14], %22 {strides = array<i32>} : memref<1x2x256xbf16, #tpu.memory_space<vmem>>, vector<1x2x256xbf16>,
    %23 = vector.extract_strided_slice %12 {offsets = [4, 0], sizes = [4, 256], strides = [1, 1]} : vector<8x256xf32> to vector<4x256xf32>
    %24 = arith.truncf %23 : vector<4x256xf32> to vector<4x256xbf16>
    %c0_15 = arith.constant 0 : index
    %c0_16 = arith.constant 0 : index
    %c0_17 = arith.constant 0 : index
    %25 = vector.load %arg8[%c0_15, %c0_16, %c0_17] : memref<1x4x256xbf16, #tpu.memory_space<vmem>>, vector<1x4x256xbf16>
    %26 = vector.shape_cast %25 : vector<1x4x256xbf16> to vector<4x256xbf16>
    %27 = vector.shape_cast %24 : vector<4x256xbf16> to vector<1x4x256xbf16>
    tpu.vector_store %arg8[%c0_15, %c0_16, %c0_17], %27 {strides = array<i32>} : memref<1x4x256xbf16, #tpu.memory_space<vmem>>, vector<1x4x256xbf16>,
    return
  }
  func.func @transform_0(%arg0: i32, %arg1: i32) -> (i32, i32, i32) {
    %c0_i32 = arith.constant 0 : i32
    %c0_i32_0 = arith.constant 0 : i32
    return %arg0, %c0_i32, %arg1 : i32, i32, i32
  }
  func.func @transform_1(%arg0: i32, %arg1: i32) -> (i32, i32) {
    %c0_i32 = arith.constant 0 : i32
    %c0_i32_0 = arith.constant 0 : i32
    %c0_i32_1 = arith.constant 0 : i32
    return %c0_i32, %c0_i32_0 : i32, i32
  }
  func.func @transform_2(%arg0: i32, %arg1: i32) -> (i32, i32) {
    %c0_i32 = arith.constant 0 : i32
    %c0_i32_0 = arith.constant 0 : i32
    %c0_i32_1 = arith.constant 0 : i32
    return %c0_i32, %c0_i32_0 : i32, i32
  }
  func.func @transform_3(%arg0: i32, %arg1: i32) -> (i32, i32) {
    %c0_i32 = arith.constant 0 : i32
    %c0_i32_0 = arith.constant 0 : i32
    %c0_i32_1 = arith.constant 0 : i32
    return %c0_i32, %c0_i32_0 : i32, i32
  }
  func.func @transform_4(%arg0: i32, %arg1: i32) -> (i32, i32, i32) {
    %c0_i32 = arith.constant 0 : i32
    %c0_i32_0 = arith.constant 0 : i32
    return %arg0, %c0_i32, %arg1 : i32, i32, i32
  }
  func.func @transform_5(%arg0: i32, %arg1: i32) -> (i32, i32, i32) {
    %c0_i32 = arith.constant 0 : i32
    %c0_i32_0 = arith.constant 0 : i32
    return %arg0, %c0_i32, %arg1 : i32, i32, i32
  }
  func.func @transform_6(%arg0: i32, %arg1: i32) -> (i32, i32, i32) {
    %c0_i32 = arith.constant 0 : i32
    %c0_i32_0 = arith.constant 0 : i32
    return %arg0, %c0_i32, %arg1 : i32, i32, i32
  }
}

</mosaic_0001>

<llo_original>
// kernel: tpu_custom_call.1
$region0: #{tpu_custom_call.1}
  #allocation0 [shape = 'u32[]', space=smem, size = 0x4, offset = 0x4, fixed_abs, tag = 'smem constant byte address 0x4 - core index']
  #allocation1 [shape = 'u32[72,128]{1,0:T(1,128)}', space=vmem, size = 0x9000, scoped, tag = 'internal scratch']
  %s0 = inlined_call_operand.vmem [shape: f32[2,4,256], index: 0, kind: input, shape index: {}]
  %s1 = inlined_call_operand.vmem [shape: f32[8,4], index: 1, kind: input, shape index: {}]
  %s2 = inlined_call_operand.vmem [shape: f32[8,1], index: 2, kind: input, shape index: {}]
  %s3 = inlined_call_operand.vmem [shape: f32[8,1], index: 3, kind: input, shape index: {}]
  %s4 = inlined_call_operand.hbm [shape: bf16[2,2,256], index: 4, kind: output, shape index: {0}]
  %s5 = inlined_call_operand.hbm [shape: bf16[2,2,256], index: 5, kind: output, shape index: {1}]
  %s6 = inlined_call_operand.hbm [shape: bf16[2,4,256], index: 6, kind: output, shape index: {2}]
  %7 = xla_tuple %s4, %s5, %s6
  %s8 = sld [smem:[#allocation0]]
  $region65: #{tpu_custom_call.1} parent=0
    _
  %s10 = ssub.s32 1, %s8
  %s11 = scalar_select 0, %s10, %s8
  $region1: #{tpu_custom_call.1} parent=0
    #allocation2 [shape = 'u8[2048]{0}', space=vmem, size = 0x800, scoped, tag = 'output window, operand 0']
    #allocation3 [shape = 's32[2]{0}', space=sflag, size = 0x8, scoped, tag = 'scoped memory for tpu_custom_call.1']
    #allocation4 [shape = 'u8[2048]{0}', space=vmem, size = 0x800, scoped, tag = 'output window, operand 1']
    #allocation5 [shape = 's32[2]{0}', space=sflag, size = 0x8, scoped, tag = 'scoped memory for tpu_custom_call.1']
    #allocation6 [shape = 'u8[4096]{0}', space=vmem, size = 0x1000, scoped, tag = 'output window, operand 2']
    %12 = vsyncpa [#allocation3], 0
    %s13 = scalar_lea.sflag [#allocation3], 1
    %14 = vsyncpa %s13, 0
    %15 = vsyncpa [#allocation5], 0
    %s16 = scalar_lea.sflag [#allocation5], 1
    %17 = vsyncpa %s16, 0
    loop: start=0, step=1, limit=4
    $region2: #{tpu_custom_call.1} parent=1 // loop_pre_header
      _
    $region3: #{tpu_custom_call.1} parent=1 // loop_header
      %s19 = sphi 0, %s23
      %p20 = scmp.ge.s32.totalorder %s19, 4
      %s26 = sphi 0, %s38
      %s27 = sphi 0, %s34
      %s28 = sphi 0, %s26
      %s29 = sphi 0, %s27
      %s30 = sphi 0, %s28
      %s31 = sphi 0, %s29
      %s43 = sphi 0, %s45
      %s46 = sphi 0, %s43
      %s47 = sphi 0, %s46
      %s63 = sphi 0, %s47
      %s67 = sphi 0, %s67
      %s69 = sphi 0, %s67
      %s70 = sphi 0, %s69
      %s84 = sphi 0, %s70
      %s88 = sphi 0, %s88
      %s90 = sphi 0, %s88
      %s91 = sphi 0, %s90
      %s105 = sphi 0, %s91
      %s109 = sphi 0, %s109
      %s111 = sphi 0, %s109
      %s112 = sphi 0, %s111
      %s126 = sphi 0, %s112
      %s134 = sphi 0, %s136
      %s137 = sphi 0, %s134
      %s138 = sphi 0, %s137
      %s154 = sphi 0, %s138
      %s162 = sphi 0, %s164
      %s165 = sphi 0, %s162
      %s166 = sphi 0, %s165
      %s182 = sphi 0, %s166
      %s190 = sphi 0, %s192
      %s193 = sphi 0, %s190
      %s194 = sphi 0, %s193
      %s210 = sphi 0, %s194
    $region4: #{tpu_custom_call.1} parent=1 // loop_header_branch
      %22 = sbr.rel (%p20) target = $region8
    $region5: #{tpu_custom_call.1} parent=1 // loop_body
      %s24 = ssub.s32 %s19, 1
      %s25 = ssub.s32 %s19, 2
      %s32 = sadd.s32 1, %s27
      %p33 = scmp.ge.s32.totalorder %s32, 1
      %s34 = scalar_select %p33, 0, %s32
      %s35 = sadd.s32 1, %s26
      %s36 = scalar_select %p33, %s35, %s26
      %p37 = scmp.ge.s32.totalorder %s36, 2
      %s38 = scalar_select %p37, 0, %s36
      %s39 = ssub.s32 %s26, %s38
      %s40 = ssub.s32 %s27, %s34
      %s41 = sor.u32 %s39, %s40
      %p42 = scmp.eq.s32.totalorder %s41, 0
      %s44 = sadd.s32 %s43, 1
      %s45 = scalar_select %p42, %s43, %s44
      %p48 = pneg %p42
      %p49 = scmp.eq.s32.totalorder %s19, 1
      %p50 = por %p48, %p49
      %p51 = scmp.ne.s32.totalorder %s43, %s46
      %p52 = scmp.eq.s32.totalorder %s19, 0
      %p53 = por %p51, %p52
      %p54 = scmp.ne.s32.totalorder %s43, %s46
      %p55 = scmp.eq.s32.totalorder %s24, 1
      %p56 = por %p54, %p55
      %p57 = scmp.ne.s32.totalorder %s46, %s47
      %p58 = scmp.eq.s32.totalorder %s24, 0
      %p59 = por %p57, %p58
      %p60 = scmp.ne.s32.totalorder %s46, %s47
      %p61 = scmp.eq.s32.totalorder %s25, 1
      %p62 = por %p60, %p61
      %p64 = scmp.ne.s32.totalorder %s47, %s63
      %p65 = scmp.eq.s32.totalorder %s25, 0
      %p66 = por %p64, %p65
      %s68 = sadd.s32 %s67, 1
      %p71 = scmp.eq.s32.totalorder %s19, 1
      %p72 = scmp.ne.s32.totalorder %s67, %s69
      %p73 = scmp.eq.s32.totalorder %s19, 0
      %p74 = por %p72, %p73
      %p75 = scmp.ne.s32.totalorder %s67, %s69
      %p76 = scmp.eq.s32.totalorder %s24, 1
      %p77 = por %p75, %p76
      %p78 = scmp.ne.s32.totalorder %s69, %s70
      %p79 = scmp.eq.s32.totalorder %s24, 0
      %p80 = por %p78, %p79
      %p81 = scmp.ne.s32.totalorder %s69, %s70
      %p82 = scmp.eq.s32.totalorder %s25, 1
      %p83 = por %p81, %p82
      %p85 = scmp.ne.s32.totalorder %s70, %s84
      %p86 = scmp.eq.s32.totalorder %s25, 0
      %p87 = por %p85, %p86
      %s89 = sadd.s32 %s88, 1
      %p92 = scmp.eq.s32.totalorder %s19, 1
      %p93 = scmp.ne.s32.totalorder %s88, %s90
      %p94 = scmp.eq.s32.totalorder %s19, 0
      %p95 = por %p93, %p94
      %p96 = scmp.ne.s32.totalorder %s88, %s90
      %p97 = scmp.eq.s32.totalorder %s24, 1
      %p98 = por %p96, %p97
      %p99 = scmp.ne.s32.totalorder %s90, %s91
      %p100 = scmp.eq.s32.totalorder %s24, 0
      %p101 = por %p99, %p100
      %p102 = scmp.ne.s32.totalorder %s90, %s91
      %p103 = scmp.eq.s32.totalorder %s25, 1
      %p104 = por %p102, %p103
      %p106 = scmp.ne.s32.totalorder %s91, %s105
      %p107 = scmp.eq.s32.totalorder %s25, 0
      %p108 = por %p106, %p107
      %s110 = sadd.s32 %s109, 1
      %p113 = scmp.eq.s32.totalorder %s19, 1
      %p114 = scmp.ne.s32.totalorder %s109, %s111
      %p115 = scmp.eq.s32.totalorder %s19, 0
      %p116 = por %p114, %p115
      %p117 = scmp.ne.s32.totalorder %s109, %s111
      %p118 = scmp.eq.s32.totalorder %s24, 1
      %p119 = por %p117, %p118
      %p120 = scmp.ne.s32.totalorder %s111, %s112
      %p121 = scmp.eq.s32.totalorder %s24, 0
      %p122 = por %p120, %p121
      %p123 = scmp.ne.s32.totalorder %s111, %s112
      %p124 = scmp.eq.s32.totalorder %s25, 1
      %p125 = por %p123, %p124
      %p127 = scmp.ne.s32.totalorder %s112, %s126
      %p128 = scmp.eq.s32.totalorder %s25, 0
      %p129 = por %p127, %p128
      %s130 = ssub.s32 %s26, %s38
      %s131 = ssub.s32 %s27, %s34
      %s132 = sor.u32 %s130, %s131
      %p133 = scmp.eq.s32.totalorder %s132, 0
      %s135 = sadd.s32 %s134, 1
      %s136 = scalar_select %p133, %s134, %s135
      %p139 = pneg %p133
      %p140 = scmp.eq.s32.totalorder %s19, 1
      %p141 = por %p139, %p140
      %p142 = scmp.ne.s32.totalorder %s134, %s137
      %p143 = scmp.eq.s32.totalorder %s19, 0
      %p144 = por %p142, %p143
      %p145 = scmp.ne.s32.totalorder %s134, %s137
      %p146 = scmp.eq.s32.totalorder %s24, 1
      %p147 = por %p145, %p146
      %p148 = scmp.ne.s32.totalorder %s137, %s138
      %p149 = scmp.eq.s32.totalorder %s24, 0
      %p150 = por %p148, %p149
      %p151 = scmp.ne.s32.totalorder %s137, %s138
      %p152 = scmp.eq.s32.totalorder %s25, 1
      %p153 = por %p151, %p152
      %p155 = scmp.ne.s32.totalorder %s138, %s154
      %p156 = scmp.eq.s32.totalorder %s25, 0
      %p157 = por %p155, %p156
      %s158 = ssub.s32 %s26, %s38
      %s159 = ssub.s32 %s27, %s34
      %s160 = sor.u32 %s158, %s159
      %p161 = scmp.eq.s32.totalorder %s160, 0
      %s163 = sadd.s32 %s162, 1
      %s164 = scalar_select %p161, %s162, %s163
      %p167 = pneg %p161
      %p168 = scmp.eq.s32.totalorder %s19, 1
      %p169 = por %p167, %p168
      %p170 = scmp.ne.s32.totalorder %s162, %s165
      %p171 = scmp.eq.s32.totalorder %s19, 0
      %p172 = por %p170, %p171
      %p173 = scmp.ne.s32.totalorder %s162, %s165
      %p174 = scmp.eq.s32.totalorder %s24, 1
      %p175 = por %p173, %p174
      %p176 = scmp.ne.s32.totalorder %s165, %s166
      %p177 = scmp.eq.s32.totalorder %s24, 0
      %p178 = por %p176, %p177
      %p179 = scmp.ne.s32.totalorder %s165, %s166
      %p180 = scmp.eq.s32.totalorder %s25, 1
      %p181 = por %p179, %p180
      %p183 = scmp.ne.s32.totalorder %s166, %s182
      %p184 = scmp.eq.s32.totalorder %s25, 0
      %p185 = por %p183, %p184
      %s186 = ssub.s32 %s26, %s38
      %s187 = ssub.s32 %s27, %s34
      %s188 = sor.u32 %s186, %s187
      %p189 = scmp.eq.s32.totalorder %s188, 0
      %s191 = sadd.s32 %s190, 1
      %s192 = scalar_select %p189, %s190, %s191
      %p195 = pneg %p189
      %p196 = scmp.eq.s32.totalorder %s19, 1
      %p197 = por %p195, %p196
      %p198 = scmp.ne.s32.totalorder %s190, %s193
      %p199 = scmp.eq.s32.totalorder %s19, 0
      %p200 = por %p198, %p199
      %p201 = scmp.ne.s32.totalorder %s190, %s193
      %p202 = scmp.eq.s32.totalorder %s24, 1
      %p203 = por %p201, %p202
      %p204 = scmp.ne.s32.totalorder %s193, %s194
      %p205 = scmp.eq.s32.totalorder %s24, 0
      %p206 = por %p204, %p205
      %p207 = scmp.ne.s32.totalorder %s193, %s194
      %p208 = scmp.eq.s32.totalorder %s25, 1
      %p209 = por %p207, %p208
      %p211 = scmp.ne.s32.totalorder %s194, %s210
      %p212 = scmp.eq.s32.totalorder %s25, 0
      %p213 = por %p211, %p212
      %p214 = scmp.le.s32.totalorder 1, %s19
      %p215 = scmp.lt.s32.totalorder %s19, 3
      %p216 = pnand %p214, %p215
      %p217 = pneg %p216
      // Predicated region
      $region9: #{tpu_custom_call.1} parent=5 // pred_check
        _
      $region10: #{tpu_custom_call.1} parent=5 // pred_check_branch
        %219 = sbr.rel (%p216) target = $region12
      $region11: #{tpu_custom_call.1} parent=5 // pred_region
        %s220 = ssub.s32 %s19, 1
        // Predicated region
        $region13: #{tpu_custom_call.1} parent=11 // pred_check
          %p221 = pneg %p80
        $region14: #{tpu_custom_call.1} parent=11 // pred_check_branch
          %223 = sbr.rel (%p221) target = $region16
        $region15: #{tpu_custom_call.1} parent=11 // pred_region
          _
        $region16: #{tpu_custom_call.1} parent=11 // pred_fallthru
          _
        // Predicated region
        $region17: #{tpu_custom_call.1} parent=11 // pred_check
          %p224 = pneg %p101
        $region18: #{tpu_custom_call.1} parent=11 // pred_check_branch
          %226 = sbr.rel (%p224) target = $region20
        $region19: #{tpu_custom_call.1} parent=11 // pred_region
          _
        $region20: #{tpu_custom_call.1} parent=11 // pred_fallthru
          _
        // Predicated region
        $region21: #{tpu_custom_call.1} parent=11 // pred_check
          %p227 = pneg %p122
        $region22: #{tpu_custom_call.1} parent=11 // pred_check_branch
          %229 = sbr.rel (%p227) target = $region24
        $region23: #{tpu_custom_call.1} parent=11 // pred_region
          _
        $region24: #{tpu_custom_call.1} parent=11 // pred_fallthru
          _
      $region12: #{tpu_custom_call.1} parent=5 // pred_fallthru
        _
      %p230 = scmp.lt.s32.totalorder %s19, 2
      // Predicated region
      $region25: #{tpu_custom_call.1} parent=5 // pred_check
        %p231 = pneg %p230
      $region26: #{tpu_custom_call.1} parent=5 // pred_check_branch
        %233 = sbr.rel (%p231) target = $region28
      $region27: #{tpu_custom_call.1} parent=5 // pred_region
        // Predicated region
        $region29: #{tpu_custom_call.1} parent=27 // pred_check
          %p234 = pneg %p53
        $region30: #{tpu_custom_call.1} parent=27 // pred_check_branch
          %236 = sbr.rel (%p234) target = $region32
        $region31: #{tpu_custom_call.1} parent=27 // pred_region
          %s237 = smul.u32 2, %s27
          %p238 = scmp.lt.s32.totalorder %s26, 1
          %s239 = scalar_select %p238, %s26, 1
          %p240 = scmp.lt.s32.totalorder %s237, 1
          %s241 = scalar_select %p240, %s237, 1
          %s242 = smul.addr %s239, 2
          %s243 = sadd.s32 %s241, %s242
          %s244 = smul.addr %s243, 4
          %s245 = scalar_lea.vmem %s0, %s244
          %s246 = smul.u32 2, %s27
        $region32: #{tpu_custom_call.1} parent=27 // pred_fallthru
          _
      $region28: #{tpu_custom_call.1} parent=5 // pred_fallthru
        _
      %p247 = scmp.le.s32.totalorder 1, %s19
      %p248 = scmp.lt.s32.totalorder %s19, 3
      %p249 = pnand %p247, %p248
      %p250 = pneg %p249
      // Predicated region
      $region33: #{tpu_custom_call.1} parent=5 // pred_check
        _
      $region34: #{tpu_custom_call.1} parent=5 // pred_check_branch
        %252 = sbr.rel (%p249) target = $region36
      $region35: #{tpu_custom_call.1} parent=5 // pred_region
        %s253 = ssub.s32 %s19, 1
        %s254 = smul.u32 2, %s29
        %p255 = scmp.lt.s32.totalorder %s28, 1
        %s256 = scalar_select %p255, %s28, 1
        %p257 = scmp.lt.s32.totalorder %s254, 1
        %s258 = scalar_select %p257, %s254, 1
        %s259 = smul.addr %s256, 2
        %s260 = sadd.s32 %s258, %s259
        %s261 = smul.addr %s260, 4
        %s262 = scalar_lea.vmem %s0, %s261
        %p263 = pneg %p59
        %p264 = pneg %p56
        %p265 = pneg %p80
        %p266 = pneg %p77
        %p267 = pneg %p101
        %p268 = pneg %p98
        %p269 = pneg %p122
        %p270 = pneg %p119
        %p271 = pneg %p150
        %p272 = pneg %p147
        %s273 = sand.u32 %s137, 1
        %s274 = scalar_lea.sflag [#allocation3], %s273
        %s275 = sand.u32 %s137, 1
        %s276 = smul.addr %s275, 2
        %s277 = scalar_lea.vmem [#allocation2], %s276
        %p278 = pneg %p178
        %p279 = pneg %p175
        %s280 = sand.u32 %s24, 1
        %s281 = scalar_lea.sflag [#allocation5], %s280
        %s282 = sand.u32 %s165, 1
        %s283 = smul.addr %s282, 2
        %s284 = scalar_lea.vmem [#allocation4], %s283
        %p285 = pneg %p206
        %p286 = pneg %p203
        %s287 = sand.u32 %s24, 1
        %s288 = scalar_lea.sflag [#allocation5], %s287
        %s289 = sand.u32 %s193, 1
        %s290 = smul.addr %s289, 4
        %s291 = scalar_lea.vmem [#allocation6], %s290
        %s292 = smul.u32 2, %s29
        %p293 = scmp.lt.s32.totalorder %s28, 1
        %s294 = scalar_select %p293, %s28, 1
        %p295 = scmp.lt.s32.totalorder %s292, 1
        %s296 = scalar_select %p295, %s292, 1
        %s297 = smul.addr %s294, 2
        %s298 = sadd.s32 %s296, %s297
        %s299 = smul.addr %s298, 4
        %s300 = scalar_lea.vmem %s0, %s299
        %s301 = smul.u32 2, %s29
        %s302 = smul.u32 2, %s29
        %s303 = smul.u32 2, %s29
        %s304 = smul.u32 2, %s29
        %v305 = vld [vmem:[%s1] sm:$0xff]
        %v306 = vld [vmem:[%s300] sm:$0xff]
        %v307 = vld [vmem:[%s2] sm:$0xff]
        %309 = vset.pattern.permute.xlu0 0
        %310 = vperm.xlu0 %309, %v307
        %v311 = vpop.permute.xlu0 %310
        %314 = vst [vmem:[#allocation1] ss:$2 sm:$0xff] %v306
        %v315 = vld.sshfl [vmem:[#allocation1] sm:$0xff pattern:$0x75316420]
        %v316 = vld.sshfl [vmem:[#allocation1 + $0x8] sm:$0xff pattern:$0x75316420]
        %vm317 = vcmask 31744
        %v319 = vsel %vm317, %v305, 0
        %vm321 = vcmask 1043456
        %v322 = vsel %vm321, %v315, 0
        %v324 = vsel %vm321, %v316, 0
        %326 = vmatpush.msra.mxu0 0.0
        %327 = vmatpush.msra.mxu0 0.0
        %328 = vmatpush.msra.mxu0 0.0
        %329 = vmatpush.msra.mxu0 0.0
        %330 = vmatpush.msra.mxu0 0.0
        %331 = vmatpush.msra.mxu0 0.0
        %332 = vmatpush.msra.mxu0 0.0
        %333 = vmatpush.msra.mxu0 0.0
        %334 = vmatpush.msra.mxu0 0.0
        %335 = vmatpush.msra.mxu0 0.0
        %336 = vmatpush.msra.mxu0 0.0
        %337 = vmatpush.msra.mxu0 0.0
        %338 = vmatpush.msra.mxu0 0.0
        %339 = vmatpush.msra.mxu0 0.0
        %340 = vmatpush.msra.mxu0 0.0
        %341 = vmatpush.msra.mxu0 %v322
        %342 = vmatmul.f32.gmra.mxu0 %v319
        %v343 = vpop.f32.mrf.mxu0
        %v344 = vadd.f32 %v311, %v343
        %345 = vdwg.mxu0
        %346 = vmatpush.msra.mxu0 0.0
        %347 = vmatpush.msra.mxu0 0.0
        %348 = vmatpush.msra.mxu0 0.0
        %349 = vmatpush.msra.mxu0 0.0
        %350 = vmatpush.msra.mxu0 0.0
        %351 = vmatpush.msra.mxu0 0.0
        %352 = vmatpush.msra.mxu0 0.0
        %353 = vmatpush.msra.mxu0 0.0
        %354 = vmatpush.msra.mxu0 0.0
        %355 = vmatpush.msra.mxu0 0.0
        %356 = vmatpush.msra.mxu0 0.0
        %357 = vmatpush.msra.mxu0 0.0
        %358 = vmatpush.msra.mxu0 0.0
        %359 = vmatpush.msra.mxu0 0.0
        %360 = vmatpush.msra.mxu0 0.0
        %361 = vmatpush.msra.mxu0 %v324
        %362 = vmatmul.f32.gmra.mxu0 %v319
        %v363 = vpop.f32.mrf.mxu0
        %v364 = vadd.f32 %v311, %v363
        %365 = vdwg.mxu0
        %vm366 = vcmp.ge.f32.partialorder %v344, 0.0
        %vm367 = vcmp.ge.f32.partialorder %v364, 0.0
        %v368 = vld [vmem:[%s3] sm:$0xff]
        %370 = vset.pattern.permute.xlu0 0
        %371 = vperm.xlu0 %370, %v368
        %v372 = vpop.permute.xlu0 %371
        %v374 = vmul.f32 %v372, %v344
        %v375 = vmul.f32 %v372, %v364
        %v376 = vsel %vm366, %v344, %v374
        %v377 = vsel %vm367, %v364, %v375
        %v378 = vpack.c.bf16 %v377, %v376
        %v380 = vrot.slane %v378, 3
        %vm381 = vcmask 1040384
        %v384 = vsel %vm381, %v378, %v380
        %386 = vst [vmem:[%s277] sm:$0x3] %v384
        %387 = vst [vmem:[#allocation1] sm:$0xff] %v378
        %s388 = scalar_lea.vmem [#allocation1], 1
        %v389 = vld [vmem:[%s388] ss:$4 sm:$0xff]
        %391 = vst [vmem:[%s284] sm:$0x3] %v389
        %392 = vst.sshfl [vmem:[#allocation1] sm:$0xff pattern:$0x75643120] %v378
        %s393 = scalar_lea.vmem [#allocation1], 1
        %v394 = vld [vmem:[%s393] ss:$2 sm:$0xff]
        %396 = vst [vmem:[%s291] sm:$0xf] %v394
        %s397 = sand.u32 %s137, 1
        %s398 = scalar_lea.sflag [#allocation3], %s397
        %s399 = sand.u32 %s137, 1
        %s400 = smul.addr %s399, 2
        %s401 = scalar_lea.vmem [#allocation2], %s400
        %s402 = sand.u32 %s24, 1
        %s403 = scalar_lea.sflag [#allocation5], %s402
        %s404 = sand.u32 %s165, 1
        %s405 = smul.addr %s404, 2
        %s406 = scalar_lea.vmem [#allocation4], %s405
        %s407 = sand.u32 %s24, 1
        %s408 = scalar_lea.sflag [#allocation5], %s407
        %s409 = sand.u32 %s193, 1
        %s410 = smul.addr %s409, 4
        %s411 = scalar_lea.vmem [#allocation6], %s410
        // Predicated region
        $region37: #{tpu_custom_call.1} parent=35 // pred_check
          %p412 = pneg %p147
        $region38: #{tpu_custom_call.1} parent=35 // pred_check_branch
          %414 = sbr.rel (%p412) target = $region40
        $region39: #{tpu_custom_call.1} parent=35 // pred_region
          %s415 = smul.u32 2, %s29
          %417 = vsyncadd %s398, 0
          %s418 = smul.addr %s28, 2
          %s419 = sadd.s32 %s415, %s418
          %s420 = scalar_lea.hbm %s4, %s419
          %s422 = sshll.u32 %s401, 4
          %s423 = int_to_ptr.vmem [resolvable:$true] %s422
          %s424 = sshll.u32 %s420, 4
          %s425 = int_to_ptr.hbm [resolvable:$true] %s424
          %427 = dma.vmem_to_hbm [thread:$0]  %s423, 32, %s425, %s398
        $region40: #{tpu_custom_call.1} parent=35 // pred_fallthru
          _
        // Predicated region
        $region41: #{tpu_custom_call.1} parent=35 // pred_check
          %p428 = pneg %p175
        $region42: #{tpu_custom_call.1} parent=35 // pred_check_branch
          %430 = sbr.rel (%p428) target = $region44
        $region43: #{tpu_custom_call.1} parent=35 // pred_region
          %s431 = smul.u32 2, %s29
          %433 = vsyncadd %s403, 0
          %s434 = smul.addr %s28, 2
          %s435 = sadd.s32 %s431, %s434
          %s436 = scalar_lea.hbm %s5, %s435
          %s438 = sshll.u32 %s406, 4
          %s439 = int_to_ptr.vmem [resolvable:$true] %s438
          %s440 = sshll.u32 %s436, 4
          %s441 = int_to_ptr.hbm [resolvable:$true] %s440
          %443 = dma.vmem_to_hbm [thread:$0]  %s439, 32, %s441, %s403
        $region44: #{tpu_custom_call.1} parent=35 // pred_fallthru
          _
        // Predicated region
        $region45: #{tpu_custom_call.1} parent=35 // pred_check
          %p444 = pneg %p203
        $region46: #{tpu_custom_call.1} parent=35 // pred_check_branch
          %446 = sbr.rel (%p444) target = $region48
        $region47: #{tpu_custom_call.1} parent=35 // pred_region
          %s447 = smul.u32 2, %s29
          %449 = vsyncadd %s408, 0
          %s450 = smul.addr %s28, 2
          %s451 = sadd.s32 %s447, %s450
          %s452 = smul.addr %s451, 2
          %s453 = scalar_lea.hbm %s6, %s452
          %s455 = sshll.u32 %s411, 4
          %s456 = int_to_ptr.vmem [resolvable:$true] %s455
          %s457 = sshll.u32 %s453, 4
          %s458 = int_to_ptr.hbm [resolvable:$true] %s457
          %460 = dma.vmem_to_hbm [thread:$0]  %s456, 64, %s458, %s408
        $region48: #{tpu_custom_call.1} parent=35 // pred_fallthru
          _
      $region36: #{tpu_custom_call.1} parent=5 // pred_fallthru
        _
      %p461 = scmp.le.s32.totalorder 2, %s19
      // Predicated region
      $region49: #{tpu_custom_call.1} parent=5 // pred_check
        %p462 = pneg %p461
      $region50: #{tpu_custom_call.1} parent=5 // pred_check_branch
        %464 = sbr.rel (%p462) target = $region52
      $region51: #{tpu_custom_call.1} parent=5 // pred_region
        %s465 = ssub.s32 %s19, 2
        // Predicated region
        $region53: #{tpu_custom_call.1} parent=51 // pred_check
          %p466 = pneg %p153
        $region54: #{tpu_custom_call.1} parent=51 // pred_check_branch
          %468 = sbr.rel (%p466) target = $region56
        $region55: #{tpu_custom_call.1} parent=51 // pred_region
          %s469 = sand.u32 %s138, 1
          %s470 = scalar_lea.sflag [#allocation3], %s469
          %s471 = sand.u32 %s138, 1
          %s472 = smul.addr %s471, 2
          %s473 = scalar_lea.vmem [#allocation2], %s472
          %475 = dma.done %s470, 32
        $region56: #{tpu_custom_call.1} parent=51 // pred_fallthru
          _
        // Predicated region
        $region57: #{tpu_custom_call.1} parent=51 // pred_check
          %p476 = pneg %p181
        $region58: #{tpu_custom_call.1} parent=51 // pred_check_branch
          %478 = sbr.rel (%p476) target = $region60
        $region59: #{tpu_custom_call.1} parent=51 // pred_region
          %s479 = sand.u32 %s25, 1
          %s480 = scalar_lea.sflag [#allocation5], %s479
          %s481 = sand.u32 %s166, 1
          %s482 = smul.addr %s481, 2
          %s483 = scalar_lea.vmem [#allocation4], %s482
          %485 = dma.done %s480, 32
        $region60: #{tpu_custom_call.1} parent=51 // pred_fallthru
          _
        // Predicated region
        $region61: #{tpu_custom_call.1} parent=51 // pred_check
          %p486 = pneg %p209
        $region62: #{tpu_custom_call.1} parent=51 // pred_check_branch
          %488 = sbr.rel (%p486) target = $region64
        $region63: #{tpu_custom_call.1} parent=51 // pred_region
          %s489 = sand.u32 %s25, 1
          %s490 = scalar_lea.sflag [#allocation5], %s489
          %s491 = sand.u32 %s194, 1
          %s492 = smul.addr %s491, 4
          %s493 = scalar_lea.vmem [#allocation6], %s492
          %495 = dma.done %s490, 64
        $region64: #{tpu_custom_call.1} parent=51 // pred_fallthru
          _
      $region52: #{tpu_custom_call.1} parent=5 // pred_fallthru
        _
    $region6: #{tpu_custom_call.1} parent=1 // loop_footer
      %s23 = sadd.s32 1, %s19
    $region7: #{tpu_custom_call.1} parent=1 // loop_footer_branch
      %18 = sbr.rel target = $region3
    $region8: #{tpu_custom_call.1} parent=1 // loop_exit
      _
    %496 = vsyncpa [#allocation3], 1
    %s497 = scalar_lea.sflag [#allocation3], 1
    %498 = vsyncpa %s497, 1
    %499 = vsyncpa [#allocation5], 1
    %s500 = scalar_lea.sflag [#allocation5], 1
    %501 = vsyncpa %s500, 1

</llo_original>
